<compile_context>
chip_gen: v7x
topology: tpu7x:2x2x1
jax: 0.10.0
libtpu: 0.0.40
codegen_flags: <defaults>
</compile_context>

<pallas_src>
import math

import jax
import jax.numpy as jnp
from jax.experimental import pallas as pl
from jax.experimental.pallas import tpu as pltpu


def _mlp_kernel(x_ref, w1_ref, b1_ref, w2_ref, b2_ref, w3_ref, b3_ref, o_ref):
    # x_ref: (TILE_N, D) f32 block of the batch, natural layout.
    x = x_ref[...]                                                  # (T, D)

    # Layer 1: contract on D with a trans-B dot_general -> feature-major (H1, T).
    h = jax.lax.dot_general(
        w1_ref[...], x, (((1,), (1,)), ((), ())),
        preferred_element_type=jnp.float32)                         # (H1, T)
    h = jnp.maximum(h + b1_ref[...], 0.0)                           # b1: (H1, 1)

    # Layer 2: (H2, H1) @ (H1, T) on the MXU.
    h2 = jnp.dot(w2_ref[...], h, preferred_element_type=jnp.float32)  # (H2, T)
    h2 = jnp.maximum(h2 + b2_ref[...], 0.0)                         # b2: (H2, 1)

    # Layer 3 (output width 1): VPU multiply by the (H2, 1) weight column plus
    # a cross-sublane (XLU) reduction -- keeps the width-1 matmul off the MXU
    # and the result lane-dense: (1, T).
    out = jnp.sum(h2 * w3_ref[...], axis=0, keepdims=True) + b3_ref[0, 0]
    o_ref[...] = out.astype(o_ref.dtype)


def cpd_online_forward(x, params, *, tile_n=4096):
    """CPD_online forward pass.

    x: (N, D) float32
    params: dict with
        w1 (H1, D), b1 (H1, 1), w2 (H2, H1), b2 (H2, 1), w3 (H2, 1), b3 (1, 1)
    returns: (N, 1) float32
    """
    n, d = x.shape
    w1, b1 = params["w1"], params["b1"]
    w2, b2 = params["w2"], params["b2"]
    w3, b3 = params["w3"], params["b3"]
    h1, h2 = w1.shape[0], w2.shape[0]

    # Lane-dense output blocks: tile_n must be a multiple of 128; don't exceed
    # the (rounded-up) batch.  The last partial block is masked by Pallas.
    tile_n = int(tile_n)
    tile_n = ((tile_n + 127) // 128) * 128
    tile_n = min(tile_n, ((n + 127) // 128) * 128)
    tile_n = max(tile_n, 128)
    num_tiles = pl.cdiv(n, tile_n)

    flops = 2 * n * (d * h1 + h1 * h2 + h2)
    param_bytes = 4 * sum(int(p.size) for p in params.values())
    bytes_accessed = 4 * n * d + 4 * n + param_bytes

    out = pl.pallas_call(
        _mlp_kernel,
        out_shape=jax.ShapeDtypeStruct((1, n), jnp.float32),
        grid=(num_tiles,),
        in_specs=[
            pl.BlockSpec((tile_n, d), lambda i: (i, 0)),            # x tile
            pl.BlockSpec(w1.shape, lambda i: (0, 0)),               # resident
            pl.BlockSpec(b1.shape, lambda i: (0, 0)),
            pl.BlockSpec(w2.shape, lambda i: (0, 0)),
            pl.BlockSpec(b2.shape, lambda i: (0, 0)),
            pl.BlockSpec(w3.shape, lambda i: (0, 0)),
            pl.BlockSpec(memory_space=pltpu.MemorySpace.SMEM),      # b3 scalar
        ],
        out_specs=pl.BlockSpec((1, tile_n), lambda i: (0, i)),      # lane-dense
        compiler_params=pltpu.CompilerParams(
            dimension_semantics=("parallel",),
            vmem_limit_bytes=32 * 1024 * 1024),
        cost_estimate=pl.CostEstimate(
            flops=flops, transcendentals=0, bytes_accessed=bytes_accessed),
    )(x, w1, b1, w2, b2, w3, b3)

    return out[0, :].reshape(n, 1)


def init_params(key, d, h1, h2):
    """Deterministic init mimicking torch.nn.Linear defaults (uniform +/- 1/sqrt(fan_in))."""
    ks = jax.random.split(key, 6)

    def lin(kw, kb, fan_in, fan_out):
        bound = 1.0 / math.sqrt(fan_in)
        w = jax.random.uniform(kw, (fan_out, fan_in), jnp.float32, -bound, bound)
        b = jax.random.uniform(kb, (fan_out, 1), jnp.float32, -bound, bound)
        return w, b

    w1, b1 = lin(ks[0], ks[1], d, h1)          # (H1, D), (H1, 1)
    w2, b2 = lin(ks[2], ks[3], h1, h2)         # (H2, H1), (H2, 1)
    w3_pt, b3 = lin(ks[4], ks[5], h2, 1)       # (1, H2), (1, 1)
    return {"w1": w1, "b1": b1, "w2": w2, "b2": b2,
            "w3": w3_pt.T, "b3": b3}           # w3 stored as (H2, 1) column


def reference_forward(x, p):
    """Pure-JAX f32 reference matching PyTorch nn.Linear semantics."""
    h = jnp.maximum(x @ p["w1"].T + p["b1"].T, 0.0)
    h = jnp.maximum(h @ p["w2"].T + p["b2"].T, 0.0)
    return h @ p["w3"] + p["b3"]


if __name__ == "__main__":
    # args defaults: dim_d=10, output_layer=[64, 64]
    D, H1, H2 = 10, 64, 64
    N = 1000          # non-multiple of the tile -> exercises the masked tail block
    TILE_N = 256      # small for the demo; default/production: 4096-16384 (sweep)

    key = jax.random.PRNGKey(0)
    kx, kp = jax.random.split(key)
    x = jax.random.normal(kx, (N, D), jnp.float32)
    params = init_params(kp, D, H1, H2)

    out = cpd_online_forward(x, params, tile_n=TILE_N)
    out = jax.block_until_ready(out)

    ref = reference_forward(x, params)
    assert out.shape == (N, 1)
    # f32 MXU path typically matches the reference to ~1e-5; bound kept loose
    # to stay robust to the backend's default matmul precision.
    max_err = float(jnp.max(jnp.abs(out - ref)))
    assert jnp.allclose(out, ref, atol=5e-2, rtol=5e-2), (
        f"mismatch vs reference (max abs err {max_err})")

    print("KERNEL_OK")
</pallas_src>

<mosaic_0001>
module attributes {stable_mosaic.version = 11 : i64} {
  func.func @_mlp_kernel(%arg0: i32, %arg1: memref<256x10xf32, #tpu.memory_space<vmem>>, %arg2: memref<64x10xf32, #tpu.memory_space<vmem>>, %arg3: memref<64x1xf32, #tpu.memory_space<vmem>>, %arg4: memref<64x64xf32, #tpu.memory_space<vmem>>, %arg5: memref<64x1xf32, #tpu.memory_space<vmem>>, %arg6: memref<64x1xf32, #tpu.memory_space<vmem>>, %arg7: memref<1x1xf32, #tpu.memory_space<smem>>, %arg8: memref<1x256xf32, #tpu.memory_space<vmem>>) attributes {dimension_semantics = [#tpu.dimension_semantics<parallel>], iteration_bounds = array<i64: 4>, scalar_prefetch = 0 : i64, scratch_operands = 0 : i64, tpu.core_type = #tpu.core_type<tc>, window_params = [{transform_indices = @transform_0, window_bounds = array<i64: 256, 10>}, {pipeline_mode = #tpu.pipeline_mode<synchronous>, transform_indices = @transform_1, window_bounds = array<i64: 64, 10>}, {pipeline_mode = #tpu.pipeline_mode<synchronous>, transform_indices = @transform_2, window_bounds = array<i64: 64, 1>}, {pipeline_mode = #tpu.pipeline_mode<synchronous>, transform_indices = @transform_3, window_bounds = array<i64: 64, 64>}, {pipeline_mode = #tpu.pipeline_mode<synchronous>, transform_indices = @transform_4, window_bounds = array<i64: 64, 1>}, {pipeline_mode = #tpu.pipeline_mode<synchronous>, transform_indices = @transform_5, window_bounds = array<i64: 64, 1>}, {transform_indices = @transform_6, window_bounds = array<i64: 1, 1>}, {transform_indices = @transform_7, window_bounds = array<i64: 1, 256>}]} {
    %c0 = arith.constant 0 : index
    %c0_0 = arith.constant 0 : index
    %0 = vector.load %arg1[%c0, %c0_0] : memref<256x10xf32, #tpu.memory_space<vmem>>, vector<256x10xf32>
    %c0_1 = arith.constant 0 : index
    %c0_2 = arith.constant 0 : index
    %1 = vector.load %arg2[%c0_1, %c0_2] : memref<64x10xf32, #tpu.memory_space<vmem>>, vector<64x10xf32>
    %cst = arith.constant dense<0.000000e+00> : vector<64x256xf32>
    %2 = tpu.matmul %1, %0, %cst {dimension_numbers = #tpu.dot_dimension_numbers<[1], [1], [0], [0], [0, 0, 1, 0], [], []>} : vector<64x10xf32>, vector<256x10xf32>, vector<64x256xf32> -> vector<64x256xf32>
    %c0_3 = arith.constant 0 : index
    %c0_4 = arith.constant 0 : index
    %3 = vector.load %arg3[%c0_3, %c0_4] : memref<64x1xf32, #tpu.memory_space<vmem>>, vector<64x1xf32>
    %4 = vector.broadcast %3 : vector<64x1xf32> to vector<64x256xf32>
    %5 = arith.addf %2, %4 : vector<64x256xf32>
    %cst_5 = arith.constant 0.000000e+00 : f32
    %6 = vector.broadcast %cst_5 : f32 to vector<64x256xf32>
    %7 = arith.maximumf %5, %6 : vector<64x256xf32>
    %c0_6 = arith.constant 0 : index
    %c0_7 = arith.constant 0 : index
    %8 = vector.load %arg4[%c0_6, %c0_7] : memref<64x64xf32, #tpu.memory_space<vmem>>, vector<64x64xf32>
    %cst_8 = arith.constant dense<0.000000e+00> : vector<64x256xf32>
    %9 = tpu.matmul %8, %7, %cst_8 {dimension_numbers = #tpu.dot_dimension_numbers<[1], [0], [0], [1], [0, 0, 1, 1], [], []>} : vector<64x64xf32>, vector<64x256xf32>, vector<64x256xf32> -> vector<64x256xf32>
    %c0_9 = arith.constant 0 : index
    %c0_10 = arith.constant 0 : index
    %10 = vector.load %arg5[%c0_9, %c0_10] : memref<64x1xf32, #tpu.memory_space<vmem>>, vector<64x1xf32>
    %11 = vector.broadcast %10 : vector<64x1xf32> to vector<64x256xf32>
    %12 = arith.addf %9, %11 : vector<64x256xf32>
    %cst_11 = arith.constant 0.000000e+00 : f32
    %13 = vector.broadcast %cst_11 : f32 to vector<64x256xf32>
    %14 = arith.maximumf %12, %13 : vector<64x256xf32>
    %c0_12 = arith.constant 0 : index
    %c0_13 = arith.constant 0 : index
    %15 = vector.load %arg6[%c0_12, %c0_13] : memref<64x1xf32, #tpu.memory_space<vmem>>, vector<64x1xf32>
    %16 = vector.broadcast %15 : vector<64x1xf32> to vector<64x256xf32>
    %17 = arith.mulf %14, %16 : vector<64x256xf32>
    %cst_14 = arith.constant dense<0.000000e+00> : vector<256xf32>
    %18 = vector.multi_reduction <add>, %17, %cst_14 [0] : vector<64x256xf32> to vector<256xf32>
    %19 = vector.shape_cast %18 : vector<256xf32> to vector<1x256xf32>
    %c0_15 = arith.constant 0 : index
    %c0_16 = arith.constant 0 : index
    %20 = memref.load %arg7[%c0_15, %c0_16] : memref<1x1xf32, #tpu.memory_space<smem>>
    %21 = vector.broadcast %20 : f32 to vector<1x256xf32>
    %22 = arith.addf %19, %21 : vector<1x256xf32>
    %c0_17 = arith.constant 0 : index
    %c0_18 = arith.constant 0 : index
    %23 = vector.load %arg8[%c0_17, %c0_18] : memref<1x256xf32, #tpu.memory_space<vmem>>, vector<1x256xf32>
    tpu.vector_store %arg8[%c0_17, %c0_18], %22 {strides = array<i32>} : memref<1x256xf32, #tpu.memory_space<vmem>>, vector<1x256xf32>,
    return
  }
  func.func @transform_0(%arg0: i32) -> (i32, i32) {
    %c0_i32 = arith.constant 0 : i32
    %c0_i32_0 = arith.constant 0 : i32
    return %arg0, %c0_i32 : i32, i32
  }
  func.func @transform_1(%arg0: i32) -> (i32, i32) {
    %c0_i32 = arith.constant 0 : i32
    %c0_i32_0 = arith.constant 0 : i32
    %c0_i32_1 = arith.constant 0 : i32
    return %c0_i32, %c0_i32_0 : i32, i32
  }
  func.func @transform_2(%arg0: i32) -> (i32, i32) {
    %c0_i32 = arith.constant 0 : i32
    %c0_i32_0 = arith.constant 0 : i32
    %c0_i32_1 = arith.constant 0 : i32
    return %c0_i32, %c0_i32_0 : i32, i32
  }
  func.func @transform_3(%arg0: i32) -> (i32, i32) {
    %c0_i32 = arith.constant 0 : i32
    %c0_i32_0 = arith.constant 0 : i32
    %c0_i32_1 = arith.constant 0 : i32
    return %c0_i32, %c0_i32_0 : i32, i32
  }
  func.func @transform_4(%arg0: i32) -> (i32, i32) {
    %c0_i32 = arith.constant 0 : i32
    %c0_i32_0 = arith.constant 0 : i32
    %c0_i32_1 = arith.constant 0 : i32
    return %c0_i32, %c0_i32_0 : i32, i32
  }
  func.func @transform_5(%arg0: i32) -> (i32, i32) {
    %c0_i32 = arith.constant 0 : i32
    %c0_i32_0 = arith.constant 0 : i32
    %c0_i32_1 = arith.constant 0 : i32
    return %c0_i32, %c0_i32_0 : i32, i32
  }
  func.func @transform_6(%arg0: i32) -> (i32, i32) {
    %c0_i32 = arith.constant 0 : i32
    %c0_i32_0 = arith.constant 0 : i32
    %c0_i32_1 = arith.constant 0 : i32
    return %c0_i32, %c0_i32_0 : i32, i32
  }
  func.func @transform_7(%arg0: i32) -> (i32, i32) {
    %c0_i32 = arith.constant 0 : i32
    %c0_i32_0 = arith.constant 0 : i32
    return %c0_i32, %arg0 : i32, i32
  }
}

</mosaic_0001>

<llo_original>
// kernel: tpu_custom_call.1
$region0: #{tpu_custom_call.1}
  #allocation0 [shape = 'u32[]', space=smem, size = 0x4, offset = 0x4, fixed_abs, tag = 'smem constant byte address 0x4 - core index']
  #allocation1 [shape = 'u32[144,128]{1,0:T(1,128)}', space=vmem, size = 0x12000, scoped, tag = 'internal scratch']
  #allocation2 [shape = 'f32[1,1]{1,0:T(1,128)S(6)}', space=smem, size = 0x200, scoped, tag = 'scoped memory for tpu_custom_call.1']
  %s0 = inlined_call_operand.vmem [shape: f32[1000,10], index: 0, kind: input, shape index: {}]
  %s1 = inlined_call_operand.vmem [shape: f32[64,10], index: 1, kind: input, shape index: {}]
  %s2 = inlined_call_operand.vmem [shape: f32[64,1], index: 2, kind: input, shape index: {}]
  %s3 = inlined_call_operand.vmem [shape: f32[64,64], index: 3, kind: input, shape index: {}]
  %s4 = inlined_call_operand.vmem [shape: f32[64,1], index: 4, kind: input, shape index: {}]
  %s5 = inlined_call_operand.vmem [shape: f32[64,1], index: 5, kind: input, shape index: {}]
  %s6 = inlined_call_operand.<no memory space> [shape: f32[1,1], index: 6, kind: input, shape index: {}]
  %s7 = inlined_call_operand.hbm [shape: f32[1,1000], index: 7, kind: output, shape index: {}]
  %s8 = sld [smem:[#allocation0]]
  $region61: #{tpu_custom_call.1} parent=0
    _
  %s10 = ssub.s32 1, %s8
  %s11 = scalar_select 0, %s10, %s8
  %12 = sst [smem:[#allocation2]] %s6
  $region1: #{tpu_custom_call.1} parent=0
    #allocation3 [shape = 'u8[2048]{0}', space=vmem, size = 0x800, scoped, tag = 'output window, operand 0']
    #allocation4 [shape = 's32[2]{0}', space=sflag, size = 0x8, scoped, tag = 'scoped memory for tpu_custom_call.1']
    %13 = vsyncpa [#allocation4], 0
    %s14 = scalar_lea.sflag [#allocation4], 1
    %15 = vsyncpa %s14, 0
    loop: start=0, step=1, limit=6
    $region2: #{tpu_custom_call.1} parent=1 // loop_pre_header
      _
    $region3: #{tpu_custom_call.1} parent=1 // loop_header
      %s17 = sphi 0, %s21
      %p18 = scmp.ge.s32.totalorder %s17, 6
      %s27 = sphi 0, %s29
      %s30 = sphi 0, %s27
      %s31 = sphi 0, %s30
      %s47 = sphi 0, %s31
      %s51 = sphi 0, %s51
      %s53 = sphi 0, %s51
      %s54 = sphi 0, %s53
      %s68 = sphi 0, %s54
      %s72 = sphi 0, %s72
      %s74 = sphi 0, %s72
      %s75 = sphi 0, %s74
      %s89 = sphi 0, %s75
      %s93 = sphi 0, %s93
      %s95 = sphi 0, %s93
      %s96 = sphi 0, %s95
      %s110 = sphi 0, %s96
      %s114 = sphi 0, %s114
      %s116 = sphi 0, %s114
      %s117 = sphi 0, %s116
      %s131 = sphi 0, %s117
      %s135 = sphi 0, %s135
      %s137 = sphi 0, %s135
      %s138 = sphi 0, %s137
      %s152 = sphi 0, %s138
      %s156 = sphi 0, %s156
      %s158 = sphi 0, %s156
      %s159 = sphi 0, %s158
      %s173 = sphi 0, %s159
      %s179 = sphi 0, %s181
      %s182 = sphi 0, %s179
      %s183 = sphi 0, %s182
      %s199 = sphi 0, %s183
    $region4: #{tpu_custom_call.1} parent=1 // loop_header_branch
      %20 = sbr.rel (%p18) target = $region8
    $region5: #{tpu_custom_call.1} parent=1 // loop_body
      %s22 = ssub.s32 %s17, 1
      %s23 = ssub.s32 %s17, 2
      %s24 = sadd.s32 %s17, 1
      %s25 = ssub.s32 %s17, %s24
      %p26 = scmp.eq.s32.totalorder %s25, 0
      %s28 = sadd.s32 %s27, 1
      %s29 = scalar_select %p26, %s27, %s28
      %p32 = pneg %p26
      %p33 = scmp.eq.s32.totalorder %s17, 3
      %p34 = por %p32, %p33
      %p35 = scmp.ne.s32.totalorder %s27, %s30
      %p36 = scmp.eq.s32.totalorder %s17, 0
      %p37 = por %p35, %p36
      %p38 = scmp.ne.s32.totalorder %s27, %s30
      %p39 = scmp.eq.s32.totalorder %s22, 3
      %p40 = por %p38, %p39
      %p41 = scmp.ne.s32.totalorder %s30, %s31
      %p42 = scmp.eq.s32.totalorder %s22, 0
      %p43 = por %p41, %p42
      %p44 = scmp.ne.s32.totalorder %s30, %s31
      %p45 = scmp.eq.s32.totalorder %s23, 3
      %p46 = por %p44, %p45
      %p48 = scmp.ne.s32.totalorder %s31, %s47
      %p49 = scmp.eq.s32.totalorder %s23, 0
      %p50 = por %p48, %p49
      %s52 = sadd.s32 %s51, 1
      %p55 = scmp.eq.s32.totalorder %s17, 3
      %p56 = scmp.ne.s32.totalorder %s51, %s53
      %p57 = scmp.eq.s32.totalorder %s17, 0
      %p58 = por %p56, %p57
      %p59 = scmp.ne.s32.totalorder %s51, %s53
      %p60 = scmp.eq.s32.totalorder %s22, 3
      %p61 = por %p59, %p60
      %p62 = scmp.ne.s32.totalorder %s53, %s54
      %p63 = scmp.eq.s32.totalorder %s22, 0
      %p64 = por %p62, %p63
      %p65 = scmp.ne.s32.totalorder %s53, %s54
      %p66 = scmp.eq.s32.totalorder %s23, 3
      %p67 = por %p65, %p66
      %p69 = scmp.ne.s32.totalorder %s54, %s68
      %p70 = scmp.eq.s32.totalorder %s23, 0
      %p71 = por %p69, %p70
      %s73 = sadd.s32 %s72, 1
      %p76 = scmp.eq.s32.totalorder %s17, 3
      %p77 = scmp.ne.s32.totalorder %s72, %s74
      %p78 = scmp.eq.s32.totalorder %s17, 0
      %p79 = por %p77, %p78
      %p80 = scmp.ne.s32.totalorder %s72, %s74
      %p81 = scmp.eq.s32.totalorder %s22, 3
      %p82 = por %p80, %p81
      %p83 = scmp.ne.s32.totalorder %s74, %s75
      %p84 = scmp.eq.s32.totalorder %s22, 0
      %p85 = por %p83, %p84
      %p86 = scmp.ne.s32.totalorder %s74, %s75
      %p87 = scmp.eq.s32.totalorder %s23, 3
      %p88 = por %p86, %p87
      %p90 = scmp.ne.s32.totalorder %s75, %s89
      %p91 = scmp.eq.s32.totalorder %s23, 0
      %p92 = por %p90, %p91
      %s94 = sadd.s32 %s93, 1
      %p97 = scmp.eq.s32.totalorder %s17, 3
      %p98 = scmp.ne.s32.totalorder %s93, %s95
      %p99 = scmp.eq.s32.totalorder %s17, 0
      %p100 = por %p98, %p99
      %p101 = scmp.ne.s32.totalorder %s93, %s95
      %p102 = scmp.eq.s32.totalorder %s22, 3
      %p103 = por %p101, %p102
      %p104 = scmp.ne.s32.totalorder %s95, %s96
      %p105 = scmp.eq.s32.totalorder %s22, 0
      %p106 = por %p104, %p105
      %p107 = scmp.ne.s32.totalorder %s95, %s96
      %p108 = scmp.eq.s32.totalorder %s23, 3
      %p109 = por %p107, %p108
      %p111 = scmp.ne.s32.totalorder %s96, %s110
      %p112 = scmp.eq.s32.totalorder %s23, 0
      %p113 = por %p111, %p112
      %s115 = sadd.s32 %s114, 1
      %p118 = scmp.eq.s32.totalorder %s17, 3
      %p119 = scmp.ne.s32.totalorder %s114, %s116
      %p120 = scmp.eq.s32.totalorder %s17, 0
      %p121 = por %p119, %p120
      %p122 = scmp.ne.s32.totalorder %s114, %s116
      %p123 = scmp.eq.s32.totalorder %s22, 3
      %p124 = por %p122, %p123
      %p125 = scmp.ne.s32.totalorder %s116, %s117
      %p126 = scmp.eq.s32.totalorder %s22, 0
      %p127 = por %p125, %p126
      %p128 = scmp.ne.s32.totalorder %s116, %s117
      %p129 = scmp.eq.s32.totalorder %s23, 3
      %p130 = por %p128, %p129
      %p132 = scmp.ne.s32.totalorder %s117, %s131
      %p133 = scmp.eq.s32.totalorder %s23, 0
      %p134 = por %p132, %p133
      %s136 = sadd.s32 %s135, 1
      %p139 = scmp.eq.s32.totalorder %s17, 3
      %p140 = scmp.ne.s32.totalorder %s135, %s137
      %p141 = scmp.eq.s32.totalorder %s17, 0
      %p142 = por %p140, %p141
      %p143 = scmp.ne.s32.totalorder %s135, %s137
      %p144 = scmp.eq.s32.totalorder %s22, 3
      %p145 = por %p143, %p144
      %p146 = scmp.ne.s32.totalorder %s137, %s138
      %p147 = scmp.eq.s32.totalorder %s22, 0
      %p148 = por %p146, %p147
      %p149 = scmp.ne.s32.totalorder %s137, %s138
      %p150 = scmp.eq.s32.totalorder %s23, 3
      %p151 = por %p149, %p150
      %p153 = scmp.ne.s32.totalorder %s138, %s152
      %p154 = scmp.eq.s32.totalorder %s23, 0
      %p155 = por %p153, %p154
      %s157 = sadd.s32 %s156, 1
      %p160 = scmp.eq.s32.totalorder %s17, 3
      %p161 = scmp.ne.s32.totalorder %s156, %s158
      %p162 = scmp.eq.s32.totalorder %s17, 0
      %p163 = por %p161, %p162
      %p164 = scmp.ne.s32.totalorder %s156, %s158
      %p165 = scmp.eq.s32.totalorder %s22, 3
      %p166 = por %p164, %p165
      %p167 = scmp.ne.s32.totalorder %s158, %s159
      %p168 = scmp.eq.s32.totalorder %s22, 0
      %p169 = por %p167, %p168
      %p170 = scmp.ne.s32.totalorder %s158, %s159
      %p171 = scmp.eq.s32.totalorder %s23, 3
      %p172 = por %p170, %p171
      %p174 = scmp.ne.s32.totalorder %s159, %s173
      %p175 = scmp.eq.s32.totalorder %s23, 0
      %p176 = por %p174, %p175
      %s177 = ssub.s32 %s17, %s24
      %p178 = scmp.eq.s32.totalorder %s177, 0
      %s180 = sadd.s32 %s179, 1
      %s181 = scalar_select %p178, %s179, %s180
      %p184 = pneg %p178
      %p185 = scmp.eq.s32.totalorder %s17, 3
      %p186 = por %p184, %p185
      %p187 = scmp.ne.s32.totalorder %s179, %s182
      %p188 = scmp.eq.s32.totalorder %s17, 0
      %p189 = por %p187, %p188
      %p190 = scmp.ne.s32.totalorder %s179, %s182
      %p191 = scmp.eq.s32.totalorder %s22, 3
      %p192 = por %p190, %p191
      %p193 = scmp.ne.s32.totalorder %s182, %s183
      %p194 = scmp.eq.s32.totalorder %s22, 0
      %p195 = por %p193, %p194
      %p196 = scmp.ne.s32.totalorder %s182, %s183
      %p197 = scmp.eq.s32.totalorder %s23, 3
      %p198 = por %p196, %p197
      %p200 = scmp.ne.s32.totalorder %s183, %s199
      %p201 = scmp.eq.s32.totalorder %s23, 0
      %p202 = por %p200, %p201
      %p203 = scmp.le.s32.totalorder 1, %s17
      %p204 = scmp.lt.s32.totalorder %s17, 5
      %p205 = pnand %p203, %p204
      %p206 = pneg %p205
      // Predicated region
      $region9: #{tpu_custom_call.1} parent=5 // pred_check
        _
      $region10: #{tpu_custom_call.1} parent=5 // pred_check_branch
        %208 = sbr.rel (%p205) target = $region12
      $region11: #{tpu_custom_call.1} parent=5 // pred_region
        %s209 = ssub.s32 %s17, 1
        // Predicated region
        $region13: #{tpu_custom_call.1} parent=11 // pred_check
          %p210 = pneg %p64
        $region14: #{tpu_custom_call.1} parent=11 // pred_check_branch
          %212 = sbr.rel (%p210) target = $region16
        $region15: #{tpu_custom_call.1} parent=11 // pred_region
          _
        $region16: #{tpu_custom_call.1} parent=11 // pred_fallthru
          _
        // Predicated region
        $region17: #{tpu_custom_call.1} parent=11 // pred_check
          %p213 = pneg %p85
        $region18: #{tpu_custom_call.1} parent=11 // pred_check_branch
          %215 = sbr.rel (%p213) target = $region20
        $region19: #{tpu_custom_call.1} parent=11 // pred_region
          _
        $region20: #{tpu_custom_call.1} parent=11 // pred_fallthru
          _
        // Predicated region
        $region21: #{tpu_custom_call.1} parent=11 // pred_check
          %p216 = pneg %p106
        $region22: #{tpu_custom_call.1} parent=11 // pred_check_branch
          %218 = sbr.rel (%p216) target = $region24
        $region23: #{tpu_custom_call.1} parent=11 // pred_region
          _
        $region24: #{tpu_custom_call.1} parent=11 // pred_fallthru
          _
        // Predicated region
        $region25: #{tpu_custom_call.1} parent=11 // pred_check
          %p219 = pneg %p127
        $region26: #{tpu_custom_call.1} parent=11 // pred_check_branch
          %221 = sbr.rel (%p219) target = $region28
        $region27: #{tpu_custom_call.1} parent=11 // pred_region
          _
        $region28: #{tpu_custom_call.1} parent=11 // pred_fallthru
          _
        // Predicated region
        $region29: #{tpu_custom_call.1} parent=11 // pred_check
          %p222 = pneg %p148
        $region30: #{tpu_custom_call.1} parent=11 // pred_check_branch
          %224 = sbr.rel (%p222) target = $region32
        $region31: #{tpu_custom_call.1} parent=11 // pred_region
          _
        $region32: #{tpu_custom_call.1} parent=11 // pred_fallthru
          _
        // Predicated region
        $region33: #{tpu_custom_call.1} parent=11 // pred_check
          %p225 = pneg %p169
        $region34: #{tpu_custom_call.1} parent=11 // pred_check_branch
          %227 = sbr.rel (%p225) target = $region36
        $region35: #{tpu_custom_call.1} parent=11 // pred_region
          _
        $region36: #{tpu_custom_call.1} parent=11 // pred_fallthru
          _
      $region12: #{tpu_custom_call.1} parent=5 // pred_fallthru
        _
      %p228 = scmp.lt.s32.totalorder %s17, 4
      // Predicated region
      $region37: #{tpu_custom_call.1} parent=5 // pred_check
        %p229 = pneg %p228
      $region38: #{tpu_custom_call.1} parent=5 // pred_check_branch
        %231 = sbr.rel (%p229) target = $region40
      $region39: #{tpu_custom_call.1} parent=5 // pred_region
        // Predicated region
        $region41: #{tpu_custom_call.1} parent=39 // pred_check
          %p232 = pneg %p37
        $region42: #{tpu_custom_call.1} parent=39 // pred_check_branch
          %234 = sbr.rel (%p232) target = $region44
        $region43: #{tpu_custom_call.1} parent=39 // pred_region
          %s235 = smul.u32 32, %s17
          %s236 = ssub.s32 125, %s235
          %p237 = scmp.lt.s32.totalorder %s236, 32
          %s238 = scalar_select %p237, %s236, 32
          %s239 = smul.u32 128, %s238
          %p240 = scmp.lt.s32.totalorder %s235, 124
          %s241 = scalar_select %p240, %s235, 124
          %s242 = smul.addr %s241, 8
          %s243 = scalar_lea.vmem %s0, %s242
          %s244 = smul.u32 32, %s17
          %s245 = ssub.s32 125, %s244
          %p246 = scmp.lt.s32.totalorder %s245, 32
          %s247 = scalar_select %p246, %s245, 32
          %s248 = smul.u32 128, %s247
        $region44: #{tpu_custom_call.1} parent=39 // pred_fallthru
          _
      $region40: #{tpu_custom_call.1} parent=5 // pred_fallthru
        _
      %p249 = scmp.le.s32.totalorder 1, %s17
      %p250 = scmp.lt.s32.totalorder %s17, 5
      %p251 = pnand %p249, %p250
      %p252 = pneg %p251
      // Predicated region
      $region45: #{tpu_custom_call.1} parent=5 // pred_check
        _
      $region46: #{tpu_custom_call.1} parent=5 // pred_check_branch
        %254 = sbr.rel (%p251) target = $region48
      $region47: #{tpu_custom_call.1} parent=5 // pred_region
        %s255 = ssub.s32 %s17, 1
        %s256 = smul.u32 32, %s22
        %s257 = ssub.s32 125, %s256
        %p258 = scmp.lt.s32.totalorder %s257, 32
        %s259 = scalar_select %p258, %s257, 32
        %s260 = smul.u32 128, %s259
        %p261 = scmp.lt.s32.totalorder %s256, 124
        %s262 = scalar_select %p261, %s256, 124
        %s263 = smul.addr %s262, 8
        %s264 = scalar_lea.vmem %s0, %s263
        %p265 = pneg %p43
        %p266 = pneg %p40
        %p267 = pneg %p64
        %p268 = pneg %p61
        %p269 = pneg %p85
        %p270 = pneg %p82
        %p271 = pneg %p106
        %p272 = pneg %p103
        %p273 = pneg %p127
        %p274 = pneg %p124
        %p275 = pneg %p148
        %p276 = pneg %p145
        %p277 = pneg %p169
        %p278 = pneg %p166
        %p279 = pneg %p195
        %p280 = pneg %p192
        %s281 = sand.u32 %s182, 1
        %s282 = scalar_lea.sflag [#allocation4], %s281
        %s283 = sand.u32 %s182, 1
        %s284 = smul.addr %s283, 2
        %s285 = scalar_lea.vmem [#allocation3], %s284
        %s286 = smul.u32 32, %s22
        %s287 = ssub.s32 125, %s286
        %p288 = scmp.lt.s32.totalorder %s287, 32
        %s289 = scalar_select %p288, %s287, 32
        %s290 = smul.u32 128, %s289
        %p291 = scmp.lt.s32.totalorder %s286, 124
        %s292 = scalar_select %p291, %s286, 124
        %s293 = smul.addr %s292, 8
        %s294 = scalar_lea.vmem %s0, %s293
        %s295 = smul.u32 32, %s22
        %s296 = ssub.s32 125, %s295
        %p297 = scmp.lt.s32.totalorder %s296, 32
        %s298 = scalar_select %p297, %s296, 32
        %s299 = smul.u32 128, %s298
        %s300 = smul.u32 2, %s22
        %v301 = vld [vmem:[%s294] sm:$0xff]
        %v302 = vld [vmem:[%s294 + $0x8] sm:$0xff]
        %v303 = vld [vmem:[%s294 + $0x10] sm:$0xff]
        %v304 = vld [vmem:[%s294 + $0x18] sm:$0xff]
        %v305 = vld [vmem:[%s294 + $0x20] sm:$0xff]
        %v306 = vld [vmem:[%s294 + $0x28] sm:$0xff]
        %v307 = vld [vmem:[%s294 + $0x30] sm:$0xff]
        %v308 = vld [vmem:[%s294 + $0x38] sm:$0xff]
        %v309 = vld [vmem:[%s294 + $0x40] sm:$0xff]
        %v310 = vld [vmem:[%s294 + $0x48] sm:$0xff]
        %v311 = vld [vmem:[%s294 + $0x50] sm:$0xff]
        %v312 = vld [vmem:[%s294 + $0x58] sm:$0xff]
        %v313 = vld [vmem:[%s294 + $0x60] sm:$0xff]
        %v314 = vld [vmem:[%s294 + $0x68] sm:$0xff]
        %v315 = vld [vmem:[%s294 + $0x70] sm:$0xff]
        %v316 = vld [vmem:[%s294 + $0x78] sm:$0xff]
        %v317 = vld [vmem:[%s294 + $0x80] sm:$0xff]
        %v318 = vld [vmem:[%s294 + $0x88] sm:$0xff]
        %v319 = vld [vmem:[%s294 + $0x90] sm:$0xff]
        %v320 = vld [vmem:[%s294 + $0x98] sm:$0xff]
        %v321 = vld [vmem:[%s294 + $0xa0] sm:$0xff]
        %v322 = vld [vmem:[%s294 + $0xa8] sm:$0xff]
        %v323 = vld [vmem:[%s294 + $0xb0] sm:$0xff]
        %v324 = vld [vmem:[%s294 + $0xb8] sm:$0xff]
        %v325 = vld [vmem:[%s294 + $0xc0] sm:$0xff]
        %v326 = vld [vmem:[%s294 + $0xc8] sm:$0xff]
        %v327 = vld [vmem:[%s294 + $0xd0] sm:$0xff]
        %v328 = vld [vmem:[%s294 + $0xd8] sm:$0xff]
        %v329 = vld [vmem:[%s294 + $0xe0] sm:$0xff]
        %v330 = vld [vmem:[%s294 + $0xe8] sm:$0xff]
        %v331 = vld [vmem:[%s294 + $0xf0] sm:$0xff]
        %v332 = vld [vmem:[%s294 + $0xf8] sm:$0xff]
        %v333 = vld [vmem:[%s1] sm:$0xff]
        %v334 = vld [vmem:[%s1 + $0x8] sm:$0xff]
        %v335 = vld [vmem:[%s1 + $0x10] sm:$0xff]
        %v336 = vld [vmem:[%s1 + $0x18] sm:$0xff]
        %v337 = vld [vmem:[%s1 + $0x20] sm:$0xff]
        %v338 = vld [vmem:[%s1 + $0x28] sm:$0xff]
        %v339 = vld [vmem:[%s1 + $0x30] sm:$0xff]
        %v340 = vld [vmem:[%s1 + $0x38] sm:$0xff]
        %v341 = vld [vmem:[%s2] sm:$0xff]
        %v342 = vld [vmem:[%s2 + $0x8] sm:$0xff]
        %v343 = vld [vmem:[%s2 + $0x10] sm:$0xff]
        %v344 = vld [vmem:[%s2 + $0x18] sm:$0xff]
        %v345 = vld [vmem:[%s2 + $0x20] sm:$0xff]
        %v346 = vld [vmem:[%s2 + $0x28] sm:$0xff]
        %v347 = vld [vmem:[%s2 + $0x30] sm:$0xff]
        %v348 = vld [vmem:[%s2 + $0x38] sm:$0xff]
        %350 = vset.pattern.permute.xlu0 0
        %351 = vperm.xlu0 %350, %v341
        %v352 = vpop.permute.xlu0 %351
        %355 = vset.pattern.permute.xlu0 0
        %356 = vperm.xlu0 %355, %v342
        %v357 = vpop.permute.xlu0 %356
        %360 = vset.pattern.permute.xlu0 0
        %361 = vperm.xlu0 %360, %v343
        %v362 = vpop.permute.xlu0 %361
        %365 = vset.pattern.permute.xlu0 0
        %366 = vperm.xlu0 %365, %v344
        %v367 = vpop.permute.xlu0 %366
        %370 = vset.pattern.permute.xlu0 0
        %371 = vperm.xlu0 %370, %v345
        %v372 = vpop.permute.xlu0 %371
        %375 = vset.pattern.permute.xlu0 0
        %376 = vperm.xlu0 %375, %v346
        %v377 = vpop.permute.xlu0 %376
        %380 = vset.pattern.permute.xlu0 0
        %381 = vperm.xlu0 %380, %v347
        %v382 = vpop.permute.xlu0 %381
        %385 = vset.pattern.permute.xlu0 0
        %386 = vperm.xlu0 %385, %v348
        %v387 = vpop.permute.xlu0 %386
        %vm389 = vcmask 80896
        %v391 = vsel %vm389, %v333, 0
        %v394 = vsel %vm389, %v334, 0
        %v397 = vsel %vm389, %v335, 0
        %v400 = vsel %vm389, %v336, 0
        %v403 = vsel %vm389, %v337, 0
        %v406 = vsel %vm389, %v338, 0
        %v409 = vsel %vm389, %v339, 0
        %v412 = vsel %vm389, %v340, 0
        %v415 = vsel %vm389, %v301, 0
        %v418 = vsel %vm389, %v302, 0
        %v421 = vsel %vm389, %v303, 0
        %v424 = vsel %vm389, %v304, 0
        %v427 = vsel %vm389, %v305, 0
        %v430 = vsel %vm389, %v306, 0
        %v433 = vsel %vm389, %v307, 0
        %v436 = vsel %vm389, %v308, 0
        %v439 = vsel %vm389, %v309, 0
        %v442 = vsel %vm389, %v310, 0
        %v445 = vsel %vm389, %v311, 0
        %v448 = vsel %vm389, %v312, 0
        %v451 = vsel %vm389, %v313, 0
        %v454 = vsel %vm389, %v314, 0
        %v457 = vsel %vm389, %v315, 0
        %v460 = vsel %vm389, %v316, 0
        %v463 = vsel %vm389, %v317, 0
        %v466 = vsel %vm389, %v318, 0
        %v469 = vsel %vm389, %v319, 0
        %v472 = vsel %vm389, %v320, 0
        %v475 = vsel %vm389, %v321, 0
        %v478 = vsel %vm389, %v322, 0
        %v481 = vsel %vm389, %v323, 0
        %v484 = vsel %vm389, %v324, 0
        %v487 = vsel %vm389, %v325, 0
        %v490 = vsel %vm389, %v326, 0
        %v493 = vsel %vm389, %v327, 0
        %v496 = vsel %vm389, %v328, 0
        %v499 = vsel %vm389, %v329, 0
        %v502 = vsel %vm389, %v330, 0
        %v505 = vsel %vm389, %v331, 0
        %v508 = vsel %vm389, %v332, 0
        %510 = vmatprep.subr.mxu0 0.0
        %511 = vmatpush1.xpose.msra.mxu0 %v415
        %512 = vmatprep.subr.mxu0 0.0
        %513 = vmatpush1.xpose.msra.mxu0 %v418
        %514 = vmatprep.subr.mxu0 0.0
        %515 = vmatpush1.xpose.msra.mxu0 %v421
        %516 = vmatprep.subr.mxu0 0.0
        %517 = vmatpush1.xpose.msra.mxu0 %v424
        %518 = vmatprep.subr.mxu0 0.0
        %519 = vmatpush1.xpose.msra.mxu0 %v427
        %520 = vmatprep.subr.mxu0 0.0
        %521 = vmatpush1.xpose.msra.mxu0 %v430
        %522 = vmatprep.subr.mxu0 0.0
        %523 = vmatpush1.xpose.msra.mxu0 %v433
        %524 = vmatprep.subr.mxu0 0.0
        %525 = vmatpush1.xpose.msra.mxu0 %v436
        %526 = vmatprep.subr.mxu0 0.0
        %527 = vmatpush1.xpose.msra.mxu0 %v439
        %528 = vmatprep.subr.mxu0 0.0
        %529 = vmatpush1.xpose.msra.mxu0 %v442
        %530 = vmatprep.subr.mxu0 0.0
        %531 = vmatpush1.xpose.msra.mxu0 %v445
        %532 = vmatprep.subr.mxu0 0.0
        %533 = vmatpush1.xpose.msra.mxu0 %v448
        %534 = vmatprep.subr.mxu0 0.0
        %535 = vmatpush1.xpose.msra.mxu0 %v451
        %536 = vmatprep.subr.mxu0 0.0
        %537 = vmatpush1.xpose.msra.mxu0 %v454
        %538 = vmatprep.subr.mxu0 0.0
        %539 = vmatpush1.xpose.msra.mxu0 %v457
        %540 = vmatprep.subr.mxu0 0.0
        %541 = vmatpush1.xpose.msra.mxu0 %v460
        %542 = vmatprep.subr.mxu0 0.0
        %543 = vmatpush1.xpose.msra.mxu0 %v463
        %544 = vmatprep.subr.mxu0 0.0
        %545 = vmatpush1.xpose.msra.mxu0 %v466
        %546 = vmatprep.subr.mxu0 0.0
        %547 = vmatpush1.xpose.msra.mxu0 %v469
        %548 = vmatprep.subr.mxu0 0.0
        %549 = vmatpush1.xpose.msra.mxu0 %v472
        %550 = vmatprep.subr.mxu0 0.0
        %551 = vmatpush1.xpose.msra.mxu0 %v475
        %552 = vmatprep.subr.mxu0 0.0
        %553 = vmatpush1.xpose.msra.mxu0 %v478
        %554 = vmatprep.subr.mxu0 0.0
        %555 = vmatpush1.xpose.msra.mxu0 %v481
        %556 = vmatprep.subr.mxu0 0.0
        %557 = vmatpush1.xpose.msra.mxu0 %v484
        %558 = vmatprep.subr.mxu0 0.0
        %559 = vmatpush1.xpose.msra.mxu0 %v487
        %560 = vmatprep.subr.mxu0 0.0
        %561 = vmatpush1.xpose.msra.mxu0 %v490
        %562 = vmatprep.subr.mxu0 0.0
        %563 = vmatpush1.xpose.msra.mxu0 %v493
        %564 = vmatprep.subr.mxu0 0.0
        %565 = vmatpush1.xpose.msra.mxu0 %v496
        %566 = vmatprep.subr.mxu0 0.0
        %567 = vmatpush1.xpose.msra.mxu0 %v499
        %568 = vmatprep.subr.mxu0 0.0
        %569 = vmatpush1.xpose.msra.mxu0 %v502
        %570 = vmatprep.subr.mxu0 0.0
        %571 = vmatpush1.xpose.msra.mxu0 %v505
        %572 = vmatprep.subr.mxu0 0.0
        %573 = vmatpush1.xpose.msra.mxu0 %v508
        %574 = vmatprep.mubr.f32.mxu0 0.0
        %575 = vmatmul.mubr.f32.gmra.mrb[0].mxu0 %v391
        %v576 = vpop.f32.mrb[0].mxu0
        %v577 = vadd.f32 %v352, %v576
        %v578 = vpop.f32.mrb[0].mxu0
        %v579 = vadd.f32 %v352, %v578
        %580 = vmatprep.mubr.f32.mxu0 0.0
        %581 = vmatmul.mubr.f32.gmra.mrb[0].mxu0 %v394
        %v582 = vpop.f32.mrb[0].mxu0
        %v583 = vadd.f32 %v357, %v582
        %v584 = vpop.f32.mrb[0].mxu0
        %v585 = vadd.f32 %v357, %v584
        %586 = vmatprep.mubr.f32.mxu0 0.0
        %587 = vmatmul.mubr.f32.gmra.mrb[0].mxu0 %v397
        %v588 = vpop.f32.mrb[0].mxu0
        %v589 = vadd.f32 %v362, %v588
        %v590 = vpop.f32.mrb[0].mxu0
        %v591 = vadd.f32 %v362, %v590
        %592 = vmatprep.mubr.f32.mxu0 0.0
        %593 = vmatmul.mubr.f32.gmra.mrb[0].mxu0 %v400
        %v594 = vpop.f32.mrb[0].mxu0
        %v595 = vadd.f32 %v367, %v594
        %v596 = vpop.f32.mrb[0].mxu0
        %v597 = vadd.f32 %v367, %v596
        %598 = vmatprep.mubr.f32.mxu0 0.0
        %599 = vmatmul.mubr.f32.gmra.mrb[0].mxu0 %v403
        %v600 = vpop.f32.mrb[0].mxu0
        %v601 = vadd.f32 %v372, %v600
        %v602 = vpop.f32.mrb[0].mxu0
        %v603 = vadd.f32 %v372, %v602
        %604 = vmatprep.mubr.f32.mxu0 0.0
        %605 = vmatmul.mubr.f32.gmra.mrb[0].mxu0 %v406
        %v606 = vpop.f32.mrb[0].mxu0
        %v607 = vadd.f32 %v377, %v606
        %v608 = vpop.f32.mrb[0].mxu0
        %v609 = vadd.f32 %v377, %v608
        %610 = vmatprep.mubr.f32.mxu0 0.0
        %611 = vmatmul.mubr.f32.gmra.mrb[0].mxu0 %v409
        %v612 = vpop.f32.mrb[0].mxu0
        %v613 = vadd.f32 %v382, %v612
        %v614 = vpop.f32.mrb[0].mxu0
        %v615 = vadd.f32 %v382, %v614
        %616 = vmatprep.mubr.f32.mxu0 0.0
        %617 = vmatmul.mubr.f32.gmra.mrb[0].mxu0 %v412
        %v618 = vpop.f32.mrb[0].mxu0
        %v619 = vadd.f32 %v387, %v618
        %v620 = vpop.f32.mrb[0].mxu0
        %v621 = vadd.f32 %v387, %v620
        %622 = vdwg.mxu0
        %v623 = vmax.f32 %v577, 0.0
        %v624 = vmax.f32 %v579, 0.0
        %v625 = vmax.f32 %v583, 0.0
        %v626 = vmax.f32 %v585, 0.0
        %v627 = vmax.f32 %v589, 0.0
        %v628 = vmax.f32 %v591, 0.0
        %v629 = vmax.f32 %v595, 0.0
        %v630 = vmax.f32 %v597, 0.0
        %v631 = vmax.f32 %v601, 0.0
        %v632 = vmax.f32 %v603, 0.0
        %v633 = vmax.f32 %v607, 0.0
        %v634 = vmax.f32 %v609, 0.0
        %v635 = vmax.f32 %v613, 0.0
        %v636 = vmax.f32 %v615, 0.0
        %v637 = vmax.f32 %v619, 0.0
        %v638 = vmax.f32 %v621, 0.0
        %v639 = vld [vmem:[%s3] sm:$0xff]
        %v640 = vld [vmem:[%s3 + $0x8] sm:$0xff]
        %v641 = vld [vmem:[%s3 + $0x10] sm:$0xff]
        %v642 = vld [vmem:[%s3 + $0x18] sm:$0xff]
        %v643 = vld [vmem:[%s3 + $0x20] sm:$0xff]
        %v644 = vld [vmem:[%s3 + $0x28] sm:$0xff]
        %v645 = vld [vmem:[%s3 + $0x30] sm:$0xff]
        %v646 = vld [vmem:[%s3 + $0x38] sm:$0xff]
        %v647 = vld [vmem:[%s4] sm:$0xff]
        %v648 = vld [vmem:[%s4 + $0x8] sm:$0xff]
        %v649 = vld [vmem:[%s4 + $0x10] sm:$0xff]
        %v650 = vld [vmem:[%s4 + $0x18] sm:$0xff]
        %v651 = vld [vmem:[%s4 + $0x20] sm:$0xff]
        %v652 = vld [vmem:[%s4 + $0x28] sm:$0xff]
        %v653 = vld [vmem:[%s4 + $0x30] sm:$0xff]
        %v654 = vld [vmem:[%s4 + $0x38] sm:$0xff]
        %656 = vset.pattern.permute.xlu0 0
        %657 = vperm.xlu0 %656, %v647
        %v658 = vpop.permute.xlu0 %657
        %661 = vset.pattern.permute.xlu0 0
        %662 = vperm.xlu0 %661, %v648
        %v663 = vpop.permute.xlu0 %662
        %666 = vset.pattern.permute.xlu0 0
        %667 = vperm.xlu0 %666, %v649
        %v668 = vpop.permute.xlu0 %667
        %671 = vset.pattern.permute.xlu0 0
        %672 = vperm.xlu0 %671, %v650
        %v673 = vpop.permute.xlu0 %672
        %676 = vset.pattern.permute.xlu0 0
        %677 = vperm.xlu0 %676, %v651
        %v678 = vpop.permute.xlu0 %677
        %681 = vset.pattern.permute.xlu0 0
        %682 = vperm.xlu0 %681, %v652
        %v683 = vpop.permute.xlu0 %682
        %686 = vset.pattern.permute.xlu0 0
        %687 = vperm.xlu0 %686, %v653
        %v688 = vpop.permute.xlu0 %687
        %691 = vset.pattern.permute.xlu0 0
        %692 = vperm.xlu0 %691, %v654
        %v693 = vpop.permute.xlu0 %692
        %vm695 = vcmask 523264
        %v697 = vsel %vm695, %v639, 0
        %v700 = vsel %vm695, %v640, 0
        %v703 = vsel %vm695, %v641, 0
        %v706 = vsel %vm695, %v642, 0
        %v709 = vsel %vm695, %v643, 0
        %v712 = vsel %vm695, %v644, 0
        %v715 = vsel %vm695, %v645, 0
        %v718 = vsel %vm695, %v646, 0
        %720 = vmatprep.subr.mxu0 %v624
        %721 = vmatpush1.msra.mxu0 %v623
        %722 = vmatprep.subr.mxu0 %v626
        %723 = vmatpush1.msra.mxu0 %v625
        %724 = vmatprep.subr.mxu0 %v628
        %725 = vmatpush1.msra.mxu0 %v627
        %726 = vmatprep.subr.mxu0 %v630
        %727 = vmatpush1.msra.mxu0 %v629
        %728 = vmatprep.subr.mxu0 %v632
        %729 = vmatpush1.msra.mxu0 %v631
        %730 = vmatprep.subr.mxu0 %v634
        %731 = vmatpush1.msra.mxu0 %v633
        %732 = vmatprep.subr.mxu0 %v636
        %733 = vmatpush1.msra.mxu0 %v635
        %734 = vmatprep.subr.mxu0 %v638
        %735 = vmatpush1.msra.mxu0 %v637
        %736 = vmatprep.subr.mxu0 0.0
        %737 = vmatpush1.msra.mxu0 0.0
        %738 = vmatprep.subr.mxu0 0.0
        %739 = vmatpush1.msra.mxu0 0.0
        %740 = vmatprep.subr.mxu0 0.0
        %741 = vmatpush1.msra.mxu0 0.0
        %742 = vmatprep.subr.mxu0 0.0
        %743 = vmatpush1.msra.mxu0 0.0
        %744 = vmatprep.subr.mxu0 0.0
        %745 = vmatpush1.msra.mxu0 0.0
        %746 = vmatprep.subr.mxu0 0.0
        %747 = vmatpush1.msra.mxu0 0.0
        %748 = vmatprep.subr.mxu0 0.0
        %749 = vmatpush1.msra.mxu0 0.0
        %750 = vmatprep.subr.mxu0 0.0
        %751 = vmatpush1.msra.mxu0 0.0
        %752 = vmatprep.subr.mxu0 0.0
        %753 = vmatpush1.msra.mxu0 0.0
        %754 = vmatprep.subr.mxu0 0.0
        %755 = vmatpush1.msra.mxu0 0.0
        %756 = vmatprep.subr.mxu0 0.0
        %757 = vmatpush1.msra.mxu0 0.0
        %758 = vmatprep.subr.mxu0 0.0
        %759 = vmatpush1.msra.mxu0 0.0
        %760 = vmatprep.subr.mxu0 0.0
        %761 = vmatpush1.msra.mxu0 0.0
        %762 = vmatprep.subr.mxu0 0.0
        %763 = vmatpush1.msra.mxu0 0.0
        %764 = vmatprep.subr.mxu0 0.0
        %765 = vmatpush1.msra.mxu0 0.0
        %766 = vmatprep.subr.mxu0 0.0
        %767 = vmatpush1.msra.mxu0 0.0
        %768 = vmatprep.subr.mxu0 0.0
        %769 = vmatpush1.msra.mxu0 0.0
        %770 = vmatprep.subr.mxu0 0.0
        %771 = vmatpush1.msra.mxu0 0.0
        %772 = vmatprep.subr.mxu0 0.0
        %773 = vmatpush1.msra.mxu0 0.0
        %774 = vmatprep.subr.mxu0 0.0
        %775 = vmatpush1.msra.mxu0 0.0
        %776 = vmatprep.subr.mxu0 0.0
        %777 = vmatpush1.msra.mxu0 0.0
        %778 = vmatprep.subr.mxu0 0.0
        %779 = vmatpush1.msra.mxu0 0.0
        %780 = vmatprep.subr.mxu0 0.0
        %781 = vmatpush1.msra.mxu0 0.0
        %782 = vmatprep.subr.mxu0 0.0
        %783 = vmatpush1.msra.mxu0 0.0
        %784 = vmatprep.mubr.f32.mxu0 0.0
        %785 = vmatmul.mubr.f32.gmra.mrb[0].mxu0 %v697
        %v786 = vpop.f32.mrb[0].mxu0
        %v787 = vadd.f32 %v658, %v786
        %v788 = vpop.f32.mrb[0].mxu0
        %v789 = vadd.f32 %v658, %v788
        %790 = vmatprep.mubr.f32.mxu0 0.0
        %791 = vmatmul.mubr.f32.gmra.mrb[0].mxu0 %v700
        %v792 = vpop.f32.mrb[0].mxu0
        %v793 = vadd.f32 %v663, %v792
        %v794 = vpop.f32.mrb[0].mxu0
        %v795 = vadd.f32 %v663, %v794
        %796 = vmatprep.mubr.f32.mxu0 0.0
        %797 = vmatmul.mubr.f32.gmra.mrb[0].mxu0 %v703
        %v798 = vpop.f32.mrb[0].mxu0
        %v799 = vadd.f32 %v668, %v798
        %v800 = vpop.f32.mrb[0].mxu0
        %v801 = vadd.f32 %v668, %v800
        %802 = vmatprep.mubr.f32.mxu0 0.0
        %803 = vmatmul.mubr.f32.gmra.mrb[0].mxu0 %v706
        %v804 = vpop.f32.mrb[0].mxu0
        %v805 = vadd.f32 %v673, %v804
        %v806 = vpop.f32.mrb[0].mxu0
        %v807 = vadd.f32 %v673, %v806
        %808 = vmatprep.mubr.f32.mxu0 0.0
        %809 = vmatmul.mubr.f32.gmra.mrb[0].mxu0 %v709
        %v810 = vpop.f32.mrb[0].mxu0
        %v811 = vadd.f32 %v678, %v810
        %v812 = vpop.f32.mrb[0].mxu0
        %v813 = vadd.f32 %v678, %v812
        %814 = vmatprep.mubr.f32.mxu0 0.0
        %815 = vmatmul.mubr.f32.gmra.mrb[0].mxu0 %v712
        %v816 = vpop.f32.mrb[0].mxu0
        %v817 = vadd.f32 %v683, %v816
        %v818 = vpop.f32.mrb[0].mxu0
        %v819 = vadd.f32 %v683, %v818
        %820 = vmatprep.mubr.f32.mxu0 0.0
        %821 = vmatmul.mubr.f32.gmra.mrb[0].mxu0 %v715
        %v822 = vpop.f32.mrb[0].mxu0
        %v823 = vadd.f32 %v688, %v822
        %v824 = vpop.f32.mrb[0].mxu0
        %v825 = vadd.f32 %v688, %v824
        %826 = vmatprep.mubr.f32.mxu0 0.0
        %827 = vmatmul.mubr.f32.gmra.mrb[0].mxu0 %v718
        %v828 = vpop.f32.mrb[0].mxu0
        %v829 = vadd.f32 %v693, %v828
        %v830 = vpop.f32.mrb[0].mxu0
        %v831 = vadd.f32 %v693, %v830
        %832 = vdwg.mxu0
        %v833 = vmax.f32 %v787, 0.0
        %v834 = vmax.f32 %v789, 0.0
        %v835 = vmax.f32 %v793, 0.0
        %v836 = vmax.f32 %v795, 0.0
        %v837 = vmax.f32 %v799, 0.0
        %v838 = vmax.f32 %v801, 0.0
        %v839 = vmax.f32 %v805, 0.0
        %v840 = vmax.f32 %v807, 0.0
        %v841 = vmax.f32 %v811, 0.0
        %v842 = vmax.f32 %v813, 0.0
        %v843 = vmax.f32 %v817, 0.0
        %v844 = vmax.f32 %v819, 0.0
        %v845 = vmax.f32 %v823, 0.0
        %v846 = vmax.f32 %v825, 0.0
        %v847 = vmax.f32 %v829, 0.0
        %v848 = vmax.f32 %v831, 0.0
        %v849 = vld [vmem:[%s5] sm:$0xff]
        %v850 = vld [vmem:[%s5 + $0x8] sm:$0xff]
        %v851 = vld [vmem:[%s5 + $0x10] sm:$0xff]
        %v852 = vld [vmem:[%s5 + $0x18] sm:$0xff]
        %v853 = vld [vmem:[%s5 + $0x20] sm:$0xff]
        %v854 = vld [vmem:[%s5 + $0x28] sm:$0xff]
        %v855 = vld [vmem:[%s5 + $0x30] sm:$0xff]
        %v856 = vld [vmem:[%s5 + $0x38] sm:$0xff]
        %858 = vset.pattern.permute.xlu0 0
        %859 = vperm.xlu0 %858, %v849
        %v860 = vpop.permute.xlu0 %859
        %863 = vset.pattern.permute.xlu0 0
        %864 = vperm.xlu0 %863, %v850
        %v865 = vpop.permute.xlu0 %864
        %868 = vset.pattern.permute.xlu0 0
        %869 = vperm.xlu0 %868, %v851
        %v870 = vpop.permute.xlu0 %869
        %873 = vset.pattern.permute.xlu0 0
        %874 = vperm.xlu0 %873, %v852
        %v875 = vpop.permute.xlu0 %874
        %878 = vset.pattern.permute.xlu0 0
        %879 = vperm.xlu0 %878, %v853
        %v880 = vpop.permute.xlu0 %879
        %883 = vset.pattern.permute.xlu0 0
        %884 = vperm.xlu0 %883, %v854
        %v885 = vpop.permute.xlu0 %884
        %888 = vset.pattern.permute.xlu0 0
        %889 = vperm.xlu0 %888, %v855
        %v890 = vpop.permute.xlu0 %889
        %893 = vset.pattern.permute.xlu0 0
        %894 = vperm.xlu0 %893, %v856
        %v895 = vpop.permute.xlu0 %894
        %v897 = vmul.f32 %v833, %v860
        %v898 = vmul.f32 %v834, %v860
        %v899 = vmul.f32 %v835, %v865
        %v900 = vmul.f32 %v836, %v865
        %v901 = vmul.f32 %v837, %v870
        %v902 = vmul.f32 %v838, %v870
        %v903 = vmul.f32 %v839, %v875
        %v904 = vmul.f32 %v840, %v875
        %v905 = vmul.f32 %v841, %v880
        %v906 = vmul.f32 %v842, %v880
        %v907 = vmul.f32 %v843, %v885
        %v908 = vmul.f32 %v844, %v885
        %v909 = vmul.f32 %v845, %v890
        %v910 = vmul.f32 %v846, %v890
        %v911 = vmul.f32 %v847, %v895
        %v912 = vmul.f32 %v848, %v895
        %v913 = vadd.f32 %v897, %v899
        %v914 = vadd.f32 %v913, %v901
        %v915 = vadd.f32 %v914, %v903
        %v916 = vadd.f32 %v915, %v905
        %v917 = vadd.f32 %v916, %v907
        %v918 = vadd.f32 %v917, %v909
        %v919 = vadd.f32 %v918, %v911
        %v920 = vrot.slane %v919, 4
        %v921 = vadd.f32 %v919, %v920
        %v922 = vrot.slane %v921, 2
        %v923 = vadd.f32 %v921, %v922
        %v924 = vrot.slane %v923, 1
        %v925 = vadd.f32 %v923, %v924
        %v926 = vadd.f32 %v898, %v900
        %v927 = vadd.f32 %v926, %v902
        %v928 = vadd.f32 %v927, %v904
        %v929 = vadd.f32 %v928, %v906
        %v930 = vadd.f32 %v929, %v908
        %v931 = vadd.f32 %v930, %v910
        %v932 = vadd.f32 %v931, %v912
        %v933 = vrot.slane %v932, 4
        %v934 = vadd.f32 %v932, %v933
        %v935 = vrot.slane %v934, 2
        %v936 = vadd.f32 %v934, %v935
        %v937 = vrot.slane %v936, 1
        %v938 = vadd.f32 %v936, %v937
        %s939 = sld [smem:[#allocation2]]
        %v940 = vstv %s939
        %v941 = vadd.f32 %v925, %v940
        %v942 = vadd.f32 %v938, %v940
        %v945 = vcombine.low %v941, %v942
        %v947 = vunpack.c.l.s4 1966171168
        %v948 = vunpack.c.0.s8 %v947
        %v949 = vlaneseq
        %v950 = vshrl.u32 %v949, 7
        %v951 = vsub.s32 %v948, %v950
        %v952 = vrot.slane %v945, %v951
        %v954 = vunpack.c.l.s4 1966171168
        %v955 = vunpack.c.0.s8 %v954
        %v956 = vlaneseq
        %v957 = vshrl.u32 %v956, 7
        %v958 = vsub.s32 %v955, %v957
        %v959 = vrot.slane %v952, %v958
        %v961 = vlaneseq
        %vm962 = vcmp.ge.s32.totalorder %v961, 0
        %vm963 = vcmp.lt.s32.totalorder %v961, 256
        %vm964 = vmand %vm962, %vm963
        %965 = vst.msk [vmem:[%s285] sm:$0x3] %vm964, %v959
        %s966 = sand.u32 %s182, 1
        %s967 = scalar_lea.sflag [#allocation4], %s966
        %s968 = sand.u32 %s182, 1
        %s969 = smul.addr %s968, 2
        %s970 = scalar_lea.vmem [#allocation3], %s969
        // Predicated region
        $region49: #{tpu_custom_call.1} parent=47 // pred_check
          %p971 = pneg %p192
        $region50: #{tpu_custom_call.1} parent=47 // pred_check_branch
          %973 = sbr.rel (%p971) target = $region52
        $region51: #{tpu_custom_call.1} parent=47 // pred_region
          %s974 = smul.u32 2, %s22
          %s976 = ssub.s32 32, 32
          %977 = vsyncadd %s967, %s976
          %s978 = smul.addr %s974, 16
          %s979 = scalar_lea.hbm %s7, %s978
          %s981 = sshll.u32 %s970, 4
          %s982 = int_to_ptr.vmem [resolvable:$true] %s981
          %984 = dma.vmem_to_hbm [thread:$0]  %s982, 32, %s979, %s967
        $region52: #{tpu_custom_call.1} parent=47 // pred_fallthru
          _
      $region48: #{tpu_custom_call.1} parent=5 // pred_fallthru
        _
      %p985 = scmp.le.s32.totalorder 2, %s17
      // Predicated region
      $region53: #{tpu_custom_call.1} parent=5 // pred_check
        %p986 = pneg %p985
      $region54: #{tpu_custom_call.1} parent=5 // pred_check_branch
        %988 = sbr.rel (%p986) target = $region56
      $region55: #{tpu_custom_call.1} parent=5 // pred_region
        %s989 = ssub.s32 %s17, 2
        // Predicated region
        $region57: #{tpu_custom_call.1} parent=55 // pred_check
          %p990 = pneg %p198
        $region58: #{tpu_custom_call.1} parent=55 // pred_check_branch
          %992 = sbr.rel (%p990) target = $region60
        $region59: #{tpu_custom_call.1} parent=55 // pred_region
          %s993 = sand.u32 %s183, 1
          %s994 = scalar_lea.sflag [#allocation4], %s993
          %s995 = sand.u32 %s183, 1
          %s996 = smul.addr %s995, 2
          %s997 = scalar_lea.vmem [#allocation3], %s996
          %998 = dma.done %s994, 32
        $region60: #{tpu_custom_call.1} parent=55 // pred_fallthru
          _
      $region56: #{tpu_custom_call.1} parent=5 // pred_fallthru
        _
    $region6: #{tpu_custom_call.1} parent=1 // loop_footer
      %s21 = sadd.s32 1, %s17
    $region7: #{tpu_custom_call.1} parent=1 // loop_footer_branch
      %16 = sbr.rel target = $region3
    $region8: #{tpu_custom_call.1} parent=1 // loop_exit
      _
    %999 = vsyncpa [#allocation4], 1
    %s1000 = scalar_lea.sflag [#allocation4], 1
    %1001 = vsyncpa %s1000, 1

</llo_original>
